<compile_context>
chip_gen: v7x
topology: tpu7x:2x2x1
jax: 0.10.0
libtpu: 0.0.40
codegen_flags: <defaults>
</compile_context>

<pallas_src>
import jax
import jax.numpy as jnp
from jax import lax
from jax.experimental import pallas as pl
from jax.experimental.pallas import tpu as pltpu


def round_up(x, m):
    return ((x + m - 1) // m) * m


# ----------------------------- EncoderCNN kernel -----------------------------

def encoder_kernel(x_ref, wproj_ref, bproj_ref, wfc_ref, bfc_ref, mask_ref,
                   out_ref, acc_ref):
    s = pl.program_id(1)

    @pl.when(s == 0)
    def _():
        acc_ref[...] = jnp.zeros_like(acc_ref)

    # Backbone proxy: 1x1-conv (C_in -> C_feat) + ReLU on this HW tile (MXU).
    x = x_ref[0]                                               # (C_in, hw_tile) bf16
    h = lax.dot_general(x, wproj_ref[...], (((0,), (0,)), ((), ())),
                        preferred_element_type=jnp.float32)    # (hw_tile, C_feat)
    h = jnp.maximum(h + bproj_ref[...], 0.0)
    # Global average pool: sublane sum on the VPU/XLU (MXU stays free); the
    # 1/HW scale is folded into w_fc at parameter-prep time.
    acc_ref[...] += jnp.sum(h, axis=0, keepdims=True)          # (1, C_feat)

    @pl.when(s == pl.num_programs(1) - 1)
    def _():
        feat = jnp.dot(acc_ref[...].astype(jnp.bfloat16), wfc_ref[...],
                       preferred_element_type=jnp.float32) + bfc_ref[...]
        feat = jnp.maximum(feat, 0.0)                          # self.relu
        out_ref[0] = feat * mask_ref[0]                        # self.dropout (mask in {0, 2})


# ----------------------------- DecoderRNN kernels ----------------------------

def make_lstm_kernel(num_layers, seq_steps, batch, h_pad):
    S, N, Hp = seq_steps, batch, h_pad                         # S = T + 1

    def kernel(ids_ref, feat_ref, emb_ref, mask_ref, *rest):
        lstm_refs = rest[:3 * num_layers]
        hid_ref = rest[3 * num_layers]                         # (S*N, Hp) out: last-layer hiddens
        xseq_ref = rest[3 * num_layers + 1]                    # (S*N, E_pad) scratch

        T = S - 1
        # torch.cat((features.unsqueeze(0), dropout(embed(captions))), dim=0)
        # Embedding = exact row gather; ids are scalars in SMEM, no one-hot matmul.
        xseq_ref[0:N, :] = feat_ref[...]
        for i in range(T * N):                                 # static loop; only table row is dynamic
            row = emb_ref[pl.ds(ids_ref[i], 1), :]             # (1, E_pad) gather
            xseq_ref[N + i:N + i + 1, :] = row * mask_ref[i:i + 1, :]

        x_in_ref = xseq_ref
        for l in range(num_layers):
            w_ih = lstm_refs[3 * l][...]
            w_hh = lstm_refs[3 * l + 1][...]
            b = lstm_refs[3 * l + 2][...]
            # Batched input projection over all (T+1)*N rows: fills the MXU M dim
            # and reads w_ih once per layer instead of once per time step.
            proj = jnp.dot(x_in_ref[...].astype(jnp.bfloat16), w_ih,
                           preferred_element_type=jnp.float32) + b    # (S*N, 4*Hp)
            h = jnp.zeros((N, Hp), jnp.float32)
            c = jnp.zeros((N, Hp), jnp.float32)
            for t in range(S):                                 # recurrence is inherently serial
                gates = proj[t * N:(t + 1) * N, :] + jnp.dot(
                    h.astype(jnp.bfloat16), w_hh,
                    preferred_element_type=jnp.float32)        # (N, 4*Hp)
                # Gates blocked i|f|o|g, each lane(128)-aligned to Hp columns:
                # one sigmoid over the contiguous 3*Hp block, one tanh for g.
                ifo = jax.nn.sigmoid(gates[:, 0:3 * Hp])
                g_g = jnp.tanh(gates[:, 3 * Hp:4 * Hp])
                c = ifo[:, Hp:2 * Hp] * c + ifo[:, 0:Hp] * g_g
                h = ifo[:, 2 * Hp:3 * Hp] * jnp.tanh(c)
                hid_ref[t * N:(t + 1) * N, :] = h
            # Next layer consumes this layer's full hidden sequence; its input
            # projection above already read x_in_ref, so overwriting is safe.
            x_in_ref = hid_ref

    return kernel


def out_linear_kernel(h_ref, w_ref, b_ref, o_ref):
    # Hoisted final nn.Linear: one ((T+1)*N, H_pad) @ (H_pad, v_tile) gemm per
    # V tile; lane-dense output tiles streamed via BlockSpec pipelining.
    o_ref[...] = (jnp.dot(h_ref[...].astype(jnp.bfloat16), w_ref[...],
                          preferred_element_type=jnp.float32) + b_ref[...])


# --------------------------------- wrapper -----------------------------------

def encoder_to_decoder_forward(images, captions, kp, dropout_key, *,
                               vocab_size, num_layers, hw_tile=2048):
    N, C_in, Himg, Wimg = images.shape
    HW = Himg * Wimg
    T = int(captions.shape[0])
    S = T + 1
    C_feat = kp["w_proj"].shape[1]
    E_pad = kp["w_fc"].shape[1]
    H_pad = kp["w_out"].shape[0]
    V_pad = kp["w_out"].shape[1]

    hw_tile = min(hw_tile, HW)
    assert HW % hw_tile == 0 and hw_tile % 128 == 0

    k_enc, k_emb = jax.random.split(dropout_key)
    enc_mask = jax.random.bernoulli(k_enc, 0.5, (N, 1, E_pad)).astype(jnp.float32) * 2.0
    emb_mask = jax.random.bernoulli(k_emb, 0.5, (T * N, E_pad)).astype(jnp.float32) * 2.0

    # NCHW kept; H*W (multiple of 128) sits on the lane axis; bf16 matmul inputs.
    x = images.reshape(N, C_in, HW).astype(jnp.bfloat16)

    features = pl.pallas_call(
        encoder_kernel,
        out_shape=jax.ShapeDtypeStruct((N, 1, E_pad), jnp.float32),
        grid=(N, HW // hw_tile),
        in_specs=[
            pl.BlockSpec((1, C_in, hw_tile), lambda n, s: (n, 0, s)),
            pl.BlockSpec((C_in, C_feat), lambda n, s: (0, 0)),
            pl.BlockSpec((1, C_feat), lambda n, s: (0, 0)),
            pl.BlockSpec((C_feat, E_pad), lambda n, s: (0, 0)),
            pl.BlockSpec((1, E_pad), lambda n, s: (0, 0)),
            pl.BlockSpec((1, 1, E_pad), lambda n, s: (n, 0, 0)),
        ],
        out_specs=pl.BlockSpec((1, 1, E_pad), lambda n, s: (n, 0, 0)),
        scratch_shapes=[pltpu.VMEM((1, C_feat), jnp.float32)],
        compiler_params=pltpu.CompilerParams(
            dimension_semantics=("parallel", "arbitrary")),
    )(x, kp["w_proj"], kp["b_proj"], kp["w_fc"], kp["b_fc"], enc_mask)
    features = features.reshape(N, E_pad)

    cap_ids = captions.reshape(T * N).astype(jnp.int32)        # SMEM scalar ids
    lstm_flat = []
    for w_ih, w_hh, b in kp["lstm"]:
        lstm_flat += [w_ih, w_hh, b]
    n_in = 4 + len(lstm_flat)

    hiddens = pl.pallas_call(
        make_lstm_kernel(num_layers, S, N, H_pad),
        out_shape=jax.ShapeDtypeStruct((S * N, H_pad), jnp.float32),
        in_specs=[pl.BlockSpec(memory_space=pltpu.MemorySpace.SMEM)]
                 + [pl.BlockSpec(memory_space=pltpu.MemorySpace.VMEM)] * (n_in - 1),
        out_specs=pl.BlockSpec(memory_space=pltpu.MemorySpace.VMEM),
        scratch_shapes=[pltpu.VMEM((S * N, E_pad), jnp.float32)],
    )(cap_ids, features, kp["emb"], emb_mask, *lstm_flat)

    v_tile = min(V_pad, 512)
    logits = pl.pallas_call(
        out_linear_kernel,
        out_shape=jax.ShapeDtypeStruct((S * N, V_pad), jnp.float32),
        grid=(V_pad // v_tile,),
        in_specs=[
            pl.BlockSpec((S * N, H_pad), lambda j: (0, 0)),
            pl.BlockSpec((H_pad, v_tile), lambda j: (0, j)),
            pl.BlockSpec((1, v_tile), lambda j: (0, j)),
        ],
        out_specs=pl.BlockSpec((S * N, v_tile), lambda j: (0, j)),
        compiler_params=pltpu.CompilerParams(dimension_semantics=("parallel",)),
    )(hiddens, kp["w_out"], kp["b_out"])

    out = logits.reshape(S, N, V_pad)
    return out[:, :, :vocab_size]


# ----------------------------- parameter helpers -----------------------------

def init_torch_style_params(key, C_in, C_feat, embed_size, hidden_size,
                            vocab_size, num_layers):
    keys = iter(jax.random.split(key, 8 + 4 * num_layers))

    def nrm(shape, scale=0.1):
        return scale * jax.random.normal(next(keys), shape, jnp.float32)

    p = {
        # frozen backbone proxy (stands in for the pretrained ResNet50 trunk)
        "proxy_w": nrm((C_in, C_feat)),
        "proxy_b": nrm((C_feat,)),
        # self.resnet.fc = nn.Linear(in_features, embed_size)   (PyTorch (out, in))
        "fc_w": nrm((embed_size, C_feat), 0.05),
        "fc_b": nrm((embed_size,), 0.05),
        # DecoderRNN
        "emb_w": nrm((vocab_size, embed_size)),                  # nn.Embedding
        "lin_w": nrm((vocab_size, hidden_size), 0.05),           # nn.Linear(hidden, vocab)
        "lin_b": nrm((vocab_size,), 0.05),
        "lstm": [],
    }
    for l in range(num_layers):
        in_l = embed_size if l == 0 else hidden_size
        p["lstm"].append({
            "w_ih": nrm((4 * hidden_size, in_l)),                # PyTorch weight_ih_l{l}
            "w_hh": nrm((4 * hidden_size, hidden_size)),         # PyTorch weight_hh_l{l}
            "b_ih": nrm((4 * hidden_size,), 0.05),
            "b_hh": nrm((4 * hidden_size,), 0.05),
        })
    return p


def prepare_kernel_params(p, embed_size, hidden_size, vocab_size,
                          e_pad, h_pad, v_pad, hw_total):
    # Transpose PyTorch (out, in) weights to math layout, zero-pad embed /
    # hidden / vocab dims to multiples of 128 (lane-dense), reorder LSTM gates
    # to i|f|o|g with per-gate H_pad blocks, fold 1/HW into w_fc, bf16 weights.
    H = hidden_size

    def pad_to(a, rows, cols):
        return jnp.pad(a, ((0, rows - a.shape[0]), (0, cols - a.shape[1])))

    def regate(w_t):                       # (in, 4H) math layout, torch order i|f|g|o
        gi, gf, gg, go = (w_t[:, k * H:(k + 1) * H] for k in range(4))
        blocks = [gi, gf, go, gg]          # -> i|f|o|g
        return jnp.concatenate(
            [jnp.pad(b, ((0, 0), (0, h_pad - H))) for b in blocks], axis=1)

    C_feat = p["proxy_w"].shape[1]
    kp = {
        "w_proj": p["proxy_w"].astype(jnp.bfloat16),                           # (C_in, C_feat)
        "b_proj": p["proxy_b"].reshape(1, C_feat),
        "w_fc": pad_to(p["fc_w"].T / float(hw_total), C_feat, e_pad).astype(jnp.bfloat16),
        "b_fc": pad_to(p["fc_b"].reshape(1, embed_size), 1, e_pad),
        "emb": pad_to(p["emb_w"], p["emb_w"].shape[0], e_pad),                 # (V, E_pad) f32, exact gather
        "w_out": pad_to(p["lin_w"].T, h_pad, v_pad).astype(jnp.bfloat16),      # (H_pad, V_pad)
        "b_out": pad_to(p["lin_b"].reshape(1, vocab_size), 1, v_pad),
        "lstm": [],
    }
    for l, layer in enumerate(p["lstm"]):
        in_real = embed_size if l == 0 else H
        in_pad = e_pad if l == 0 else h_pad
        w_ih = regate(layer["w_ih"].T)                                         # (in_real, 4*H_pad)
        w_ih = jnp.pad(w_ih, ((0, in_pad - in_real), (0, 0)))
        w_hh = regate(layer["w_hh"].T)                                         # (H, 4*H_pad)
        w_hh = jnp.pad(w_hh, ((0, h_pad - H), (0, 0)))
        b = regate((layer["b_ih"] + layer["b_hh"]).reshape(1, 4 * H))          # (1, 4*H_pad) f32
        kp["lstm"].append((w_ih.astype(jnp.bfloat16),
                           w_hh.astype(jnp.bfloat16), b))
    return kp


if __name__ == "__main__":
    # Small deterministic setup (resnet50 fc.in_features=2048 scaled down to 256).
    N, C_in, Himg, Wimg = 2, 3, 16, 16          # HW = 256 -> one lane-dense HW tile per image
    C_feat = 256
    embed_size, hidden_size, vocab_size, num_layers = 32, 32, 64, 2
    seq_len = 8

    E_pad = round_up(embed_size, 128)
    H_pad = round_up(hidden_size, 128)
    V_pad = round_up(vocab_size, 128)

    key = jax.random.PRNGKey(0)
    k_param, k_img, k_cap, k_drop = jax.random.split(key, 4)
    raw = init_torch_style_params(k_param, C_in, C_feat, embed_size,
                                  hidden_size, vocab_size, num_layers)
    kp = prepare_kernel_params(raw, embed_size, hidden_size, vocab_size,
                               E_pad, H_pad, V_pad, Himg * Wimg)

    images = jax.random.normal(k_img, (N, C_in, Himg, Wimg), jnp.float32)
    captions = jax.random.randint(k_cap, (seq_len, N), 0, vocab_size, dtype=jnp.int32)

    out = encoder_to_decoder_forward(images, captions, kp, k_drop,
                                     vocab_size=vocab_size,
                                     num_layers=num_layers)
    out = jax.block_until_ready(out)
    assert out.shape == (seq_len + 1, N, vocab_size), out.shape
    assert out.dtype == jnp.float32
    print("KERNEL_OK")
</pallas_src>

<mosaic_0001>
module attributes {stable_mosaic.version = 11 : i64} {
  func.func @encoder_kernel(%arg0: i32, %arg1: i32, %arg2: memref<1x3x256xbf16, #tpu.memory_space<vmem>>, %arg3: memref<3x256xbf16, #tpu.memory_space<vmem>>, %arg4: memref<1x256xf32, #tpu.memory_space<vmem>>, %arg5: memref<256x128xbf16, #tpu.memory_space<vmem>>, %arg6: memref<1x128xf32, #tpu.memory_space<vmem>>, %arg7: memref<1x1x128xf32, #tpu.memory_space<vmem>>, %arg8: memref<1x1x128xf32, #tpu.memory_space<vmem>>, %arg9: memref<1x256xf32, #tpu.memory_space<vmem>>) attributes {dimension_semantics = [#tpu.dimension_semantics<parallel>, #tpu.dimension_semantics<arbitrary>], iteration_bounds = array<i64: 2, 1>, scalar_prefetch = 0 : i64, scratch_operands = 1 : i64, tpu.core_type = #tpu.core_type<tc>, window_params = [{transform_indices = @transform_0, window_bounds = array<i64: 1, 3, 256>}, {pipeline_mode = #tpu.pipeline_mode<synchronous>, transform_indices = @transform_1, window_bounds = array<i64: 3, 256>}, {pipeline_mode = #tpu.pipeline_mode<synchronous>, transform_indices = @transform_2, window_bounds = array<i64: 1, 256>}, {pipeline_mode = #tpu.pipeline_mode<synchronous>, transform_indices = @transform_3, window_bounds = array<i64: 256, 128>}, {pipeline_mode = #tpu.pipeline_mode<synchronous>, transform_indices = @transform_4, window_bounds = array<i64: 1, 128>}, {transform_indices = @transform_5, window_bounds = array<i64: 1, 1, 128>}, {transform_indices = @transform_6, window_bounds = array<i64: 1, 1, 128>}]} {
    %c0_i32 = arith.constant 0 : i32
    %0 = arith.cmpi eq, %arg1, %c0_i32 : i32
    %1 = arith.extui %0 : i1 to i32
    %c0_i32_0 = arith.constant 0 : i32
    %2 = arith.cmpi ne, %1, %c0_i32_0 : i32
    scf.if %2 {
      %cst_15 = arith.constant 0.000000e+00 : f32
      %20 = vector.broadcast %cst_15 : f32 to vector<1x256xf32>
      %c0_16 = arith.constant 0 : index
      %c0_17 = arith.constant 0 : index
      %21 = vector.load %arg9[%c0_16, %c0_17] : memref<1x256xf32, #tpu.memory_space<vmem>>, vector<1x256xf32>
      tpu.vector_store %arg9[%c0_16, %c0_17], %20 {strides = array<i32>} : memref<1x256xf32, #tpu.memory_space<vmem>>, vector<1x256xf32>,
    } else {
    }
    %c0 = arith.constant 0 : index
    %c0_1 = arith.constant 0 : index
    %c0_2 = arith.constant 0 : index
    %3 = vector.load %arg2[%c0, %c0_1, %c0_2] : memref<1x3x256xbf16, #tpu.memory_space<vmem>>, vector<1x3x256xbf16>
    %4 = vector.shape_cast %3 : vector<1x3x256xbf16> to vector<3x256xbf16>
    %c0_3 = arith.constant 0 : index
    %c0_4 = arith.constant 0 : index
    %5 = vector.load %arg3[%c0_3, %c0_4] : memref<3x256xbf16, #tpu.memory_space<vmem>>, vector<3x256xbf16>
    %cst = arith.constant dense<0.000000e+00> : vector<256x256xf32>
    %6 = tpu.matmul %4, %5, %cst {dimension_numbers = #tpu.dot_dimension_numbers<[0], [0], [1], [1], [0, 1, 1, 1], [], []>} : vector<3x256xbf16>, vector<3x256xbf16>, vector<256x256xf32> -> vector<256x256xf32>
    %c0_5 = arith.constant 0 : index
    %c0_6 = arith.constant 0 : index
    %7 = vector.load %arg4[%c0_5, %c0_6] : memref<1x256xf32, #tpu.memory_space<vmem>>, vector<1x256xf32>
    %8 = vector.broadcast %7 : vector<1x256xf32> to vector<256x256xf32>
    %9 = arith.addf %6, %8 : vector<256x256xf32>
    %cst_7 = arith.constant 0.000000e+00 : f32
    %10 = vector.broadcast %cst_7 : f32 to vector<256x256xf32>
    %11 = arith.maximumf %9, %10 : vector<256x256xf32>
    %c0_8 = arith.constant 0 : index
    %c0_9 = arith.constant 0 : index
    %12 = vector.load %arg9[%c0_8, %c0_9] : memref<1x256xf32, #tpu.memory_space<vmem>>, vector<1x256xf32>
    %cst_10 = arith.constant dense<0.000000e+00> : vector<256xf32>
    %13 = vector.multi_reduction <add>, %11, %cst_10 [0] : vector<256x256xf32> to vector<256xf32>
    %14 = vector.shape_cast %13 : vector<256xf32> to vector<1x256xf32>
    %15 = arith.addf %12, %14 : vector<1x256xf32>
    %c0_11 = arith.constant 0 : index
    %c0_12 = arith.constant 0 : index
    %16 = vector.load %arg9[%c0_11, %c0_12] : memref<1x256xf32, #tpu.memory_space<vmem>>, vector<1x256xf32>
    tpu.vector_store %arg9[%c0_11, %c0_12], %15 {strides = array<i32>} : memref<1x256xf32, #tpu.memory_space<vmem>>, vector<1x256xf32>,
    %c0_i32_13 = arith.constant 0 : i32
    %17 = arith.cmpi eq, %arg1, %c0_i32_13 : i32
    %18 = arith.extui %17 : i1 to i32
    %c0_i32_14 = arith.constant 0 : i32
    %19 = arith.cmpi ne, %18, %c0_i32_14 : i32
    scf.if %19 {
      %c0_15 = arith.constant 0 : index
      %c0_16 = arith.constant 0 : index
      %20 = vector.load %arg9[%c0_15, %c0_16] : memref<1x256xf32, #tpu.memory_space<vmem>>, vector<1x256xf32>
      %21 = arith.truncf %20 : vector<1x256xf32> to vector<1x256xbf16>
      %c0_17 = arith.constant 0 : index
      %c0_18 = arith.constant 0 : index
      %22 = vector.load %arg5[%c0_17, %c0_18] : memref<256x128xbf16, #tpu.memory_space<vmem>>, vector<256x128xbf16>
      %cst_19 = arith.constant dense<0.000000e+00> : vector<1x128xf32>
      %23 = tpu.matmul %21, %22, %cst_19 {dimension_numbers = #tpu.dot_dimension_numbers<[1], [0], [0], [1], [0, 0, 1, 1], [], []>} : vector<1x256xbf16>, vector<256x128xbf16>, vector<1x128xf32> -> vector<1x128xf32>
      %c0_20 = arith.constant 0 : index
      %c0_21 = arith.constant 0 : index
      %24 = vector.load %arg6[%c0_20, %c0_21] : memref<1x128xf32, #tpu.memory_space<vmem>>, vector<1x128xf32>
      %25 = arith.addf %23, %24 : vector<1x128xf32>
      %cst_22 = arith.constant 0.000000e+00 : f32
      %26 = vector.broadcast %cst_22 : f32 to vector<1x128xf32>
      %27 = arith.maximumf %25, %26 : vector<1x128xf32>
      %c0_23 = arith.constant 0 : index
      %c0_24 = arith.constant 0 : index
      %c0_25 = arith.constant 0 : index
      %28 = vector.load %arg7[%c0_23, %c0_24, %c0_25] : memref<1x1x128xf32, #tpu.memory_space<vmem>>, vector<1x1x128xf32>
      %29 = vector.shape_cast %28 : vector<1x1x128xf32> to vector<1x128xf32>
      %30 = arith.mulf %27, %29 : vector<1x128xf32>
      %c0_26 = arith.constant 0 : index
      %c0_27 = arith.constant 0 : index
      %c0_28 = arith.constant 0 : index
      %31 = vector.load %arg8[%c0_26, %c0_27, %c0_28] : memref<1x1x128xf32, #tpu.memory_space<vmem>>, vector<1x1x128xf32>
      %32 = vector.shape_cast %31 : vector<1x1x128xf32> to vector<1x128xf32>
      %33 = vector.shape_cast %30 : vector<1x128xf32> to vector<1x1x128xf32>
      tpu.vector_store %arg8[%c0_26, %c0_27, %c0_28], %33 {strides = array<i32>} : memref<1x1x128xf32, #tpu.memory_space<vmem>>, vector<1x1x128xf32>,
    } else {
    }
    return
  }
  func.func @transform_0(%arg0: i32, %arg1: i32) -> (i32, i32, i32) {
    %c0_i32 = arith.constant 0 : i32
    %c0_i32_0 = arith.constant 0 : i32
    return %arg0, %c0_i32, %arg1 : i32, i32, i32
  }
  func.func @transform_1(%arg0: i32, %arg1: i32) -> (i32, i32) {
    %c0_i32 = arith.constant 0 : i32
    %c0_i32_0 = arith.constant 0 : i32
    %c0_i32_1 = arith.constant 0 : i32
    return %c0_i32, %c0_i32_0 : i32, i32
  }
  func.func @transform_2(%arg0: i32, %arg1: i32) -> (i32, i32) {
    %c0_i32 = arith.constant 0 : i32
    %c0_i32_0 = arith.constant 0 : i32
    %c0_i32_1 = arith.constant 0 : i32
    return %c0_i32, %c0_i32_0 : i32, i32
  }
  func.func @transform_3(%arg0: i32, %arg1: i32) -> (i32, i32) {
    %c0_i32 = arith.constant 0 : i32
    %c0_i32_0 = arith.constant 0 : i32
    %c0_i32_1 = arith.constant 0 : i32
    return %c0_i32, %c0_i32_0 : i32, i32
  }
  func.func @transform_4(%arg0: i32, %arg1: i32) -> (i32, i32) {
    %c0_i32 = arith.constant 0 : i32
    %c0_i32_0 = arith.constant 0 : i32
    %c0_i32_1 = arith.constant 0 : i32
    return %c0_i32, %c0_i32_0 : i32, i32
  }
  func.func @transform_5(%arg0: i32, %arg1: i32) -> (i32, i32, i32) {
    %c0_i32 = arith.constant 0 : i32
    %c0_i32_0 = arith.constant 0 : i32
    %c0_i32_1 = arith.constant 0 : i32
    return %arg0, %c0_i32, %c0_i32_0 : i32, i32, i32
  }
  func.func @transform_6(%arg0: i32, %arg1: i32) -> (i32, i32, i32) {
    %c0_i32 = arith.constant 0 : i32
    %c0_i32_0 = arith.constant 0 : i32
    %c0_i32_1 = arith.constant 0 : i32
    return %arg0, %c0_i32, %c0_i32_0 : i32, i32, i32
  }
}

</mosaic_0001>

<llo_original>
// kernel: tpu_custom_call.1
$region0: #{tpu_custom_call.1}
  #allocation0 [shape = 'u32[]', space=smem, size = 0x4, offset = 0x4, fixed_abs, tag = 'smem constant byte address 0x4 - core index']
  #allocation1 [shape = 'u32[144,128]{1,0:T(1,128)}', space=vmem, size = 0x12000, scoped, tag = 'internal scratch']
  #allocation2 [shape = 'f32[1,256]{1,0:T(1,128)}', space=vmem, size = 0x400, scoped, tag = 'scratch operand']
  %s0 = inlined_call_operand.vmem [shape: bf16[2,3,256], index: 0, kind: input, shape index: {}]
  %s1 = inlined_call_operand.vmem [shape: bf16[3,256], index: 1, kind: input, shape index: {}]
  %s2 = inlined_call_operand.vmem [shape: f32[1,256], index: 2, kind: input, shape index: {}]
  %s3 = inlined_call_operand.hbm [shape: bf16[256,128], index: 3, kind: input, shape index: {}]
  %s4 = inlined_call_operand.vmem [shape: f32[1,128], index: 4, kind: input, shape index: {}]
  %s5 = inlined_call_operand.vmem [shape: f32[2,1,128], index: 5, kind: input, shape index: {}]
  %s6 = inlined_call_operand.hbm [shape: f32[2,1,128], index: 6, kind: output, shape index: {}]
  %s7 = sld [smem:[#allocation0]]
  $region69: #{tpu_custom_call.1} parent=0
    _
  %s9 = ssub.s32 1, %s7
  %s10 = scalar_select 0, %s9, %s7
  $region1: #{tpu_custom_call.1} parent=0
    #allocation3 [shape = 'u8[65536]{0}', space=vmem, size = 0x10000, scoped, tag = 'input window, operand 3, single buffered']
    #allocation4 [shape = 's32[2]{0}', space=sflag, size = 0x8, scoped, tag = 'scoped memory for tpu_custom_call.1']
    #allocation5 [shape = 's32[2]{0}', space=sflag, size = 0x8, scoped, tag = 'scoped memory for tpu_custom_call.1']
    #allocation6 [shape = 'u8[1024]{0}', space=vmem, size = 0x400, scoped, tag = 'output window, operand 0']
    %11 = vsyncpa [#allocation4], 0
    %12 = vsyncpa [#allocation5], 0
    %s13 = scalar_lea.sflag [#allocation5], 1
    %14 = vsyncpa %s13, 0
    loop: start=0, step=1, limit=4
    $region2: #{tpu_custom_call.1} parent=1 // loop_pre_header
      _
    $region3: #{tpu_custom_call.1} parent=1 // loop_header
      %s16 = sphi 0, %s20
      %p17 = scmp.ge.s32.totalorder %s16, 4
      %s23 = sphi 0, %s35
      %s24 = sphi 0, %s31
      %s25 = sphi 0, %s23
      %s26 = sphi 0, %s24
      %s27 = sphi 0, %s25
      %s28 = sphi 0, %s26
      %s40 = sphi 0, %s42
      %s43 = sphi 0, %s40
      %s44 = sphi 0, %s43
      %s60 = sphi 0, %s44
      %s64 = sphi 0, %s64
      %s66 = sphi 0, %s64
      %s67 = sphi 0, %s66
      %s81 = sphi 0, %s67
      %s85 = sphi 0, %s85
      %s87 = sphi 0, %s85
      %s88 = sphi 0, %s87
      %s102 = sphi 0, %s88
      %s106 = sphi 0, %s106
      %s108 = sphi 0, %s106
      %s109 = sphi 0, %s108
      %s123 = sphi 0, %s109
      %s127 = sphi 0, %s127
      %s129 = sphi 0, %s127
      %s130 = sphi 0, %s129
      %s144 = sphi 0, %s130
      %s150 = sphi 0, %s152
      %s153 = sphi 0, %s150
      %s154 = sphi 0, %s153
      %s170 = sphi 0, %s154
      %s176 = sphi 0, %s178
      %s179 = sphi 0, %s176
      %s180 = sphi 0, %s179
      %s196 = sphi 0, %s180
    $region4: #{tpu_custom_call.1} parent=1 // loop_header_branch
      %19 = sbr.rel (%p17) target = $region8
    $region5: #{tpu_custom_call.1} parent=1 // loop_body
      %s21 = ssub.s32 %s16, 1
      %s22 = ssub.s32 %s16, 2
      %s29 = sadd.s32 1, %s24
      %p30 = scmp.ge.s32.totalorder %s29, 1
      %s31 = scalar_select %p30, 0, %s29
      %s32 = sadd.s32 1, %s23
      %s33 = scalar_select %p30, %s32, %s23
      %p34 = scmp.ge.s32.totalorder %s33, 2
      %s35 = scalar_select %p34, 0, %s33
      %s36 = ssub.s32 %s23, %s35
      %s37 = ssub.s32 %s24, %s31
      %s38 = sor.u32 %s36, %s37
      %p39 = scmp.eq.s32.totalorder %s38, 0
      %s41 = sadd.s32 %s40, 1
      %s42 = scalar_select %p39, %s40, %s41
      %p45 = pneg %p39
      %p46 = scmp.eq.s32.totalorder %s16, 1
      %p47 = por %p45, %p46
      %p48 = scmp.ne.s32.totalorder %s40, %s43
      %p49 = scmp.eq.s32.totalorder %s16, 0
      %p50 = por %p48, %p49
      %p51 = scmp.ne.s32.totalorder %s40, %s43
      %p52 = scmp.eq.s32.totalorder %s21, 1
      %p53 = por %p51, %p52
      %p54 = scmp.ne.s32.totalorder %s43, %s44
      %p55 = scmp.eq.s32.totalorder %s21, 0
      %p56 = por %p54, %p55
      %p57 = scmp.ne.s32.totalorder %s43, %s44
      %p58 = scmp.eq.s32.totalorder %s22, 1
      %p59 = por %p57, %p58
      %p61 = scmp.ne.s32.totalorder %s44, %s60
      %p62 = scmp.eq.s32.totalorder %s22, 0
      %p63 = por %p61, %p62
      %s65 = sadd.s32 %s64, 1
      %p68 = scmp.eq.s32.totalorder %s16, 1
      %p69 = scmp.ne.s32.totalorder %s64, %s66
      %p70 = scmp.eq.s32.totalorder %s16, 0
      %p71 = por %p69, %p70
      %p72 = scmp.ne.s32.totalorder %s64, %s66
      %p73 = scmp.eq.s32.totalorder %s21, 1
      %p74 = por %p72, %p73
      %p75 = scmp.ne.s32.totalorder %s66, %s67
      %p76 = scmp.eq.s32.totalorder %s21, 0
      %p77 = por %p75, %p76
      %p78 = scmp.ne.s32.totalorder %s66, %s67
      %p79 = scmp.eq.s32.totalorder %s22, 1
      %p80 = por %p78, %p79
      %p82 = scmp.ne.s32.totalorder %s67, %s81
      %p83 = scmp.eq.s32.totalorder %s22, 0
      %p84 = por %p82, %p83
      %s86 = sadd.s32 %s85, 1
      %p89 = scmp.eq.s32.totalorder %s16, 1
      %p90 = scmp.ne.s32.totalorder %s85, %s87
      %p91 = scmp.eq.s32.totalorder %s16, 0
      %p92 = por %p90, %p91
      %p93 = scmp.ne.s32.totalorder %s85, %s87
      %p94 = scmp.eq.s32.totalorder %s21, 1
      %p95 = por %p93, %p94
      %p96 = scmp.ne.s32.totalorder %s87, %s88
      %p97 = scmp.eq.s32.totalorder %s21, 0
      %p98 = por %p96, %p97
      %p99 = scmp.ne.s32.totalorder %s87, %s88
      %p100 = scmp.eq.s32.totalorder %s22, 1
      %p101 = por %p99, %p100
      %p103 = scmp.ne.s32.totalorder %s88, %s102
      %p104 = scmp.eq.s32.totalorder %s22, 0
      %p105 = por %p103, %p104
      %s107 = sadd.s32 %s106, 1
      %p110 = scmp.eq.s32.totalorder %s16, 1
      %p111 = scmp.ne.s32.totalorder %s106, %s108
      %p112 = scmp.eq.s32.totalorder %s16, 0
      %p113 = por %p111, %p112
      %p114 = scmp.ne.s32.totalorder %s106, %s108
      %p115 = scmp.eq.s32.totalorder %s21, 1
      %p116 = por %p114, %p115
      %p117 = scmp.ne.s32.totalorder %s108, %s109
      %p118 = scmp.eq.s32.totalorder %s21, 0
      %p119 = por %p117, %p118
      %p120 = scmp.ne.s32.totalorder %s108, %s109
      %p121 = scmp.eq.s32.totalorder %s22, 1
      %p122 = por %p120, %p121
      %p124 = scmp.ne.s32.totalorder %s109, %s123
      %p125 = scmp.eq.s32.totalorder %s22, 0
      %p126 = por %p124, %p125
      %s128 = sadd.s32 %s127, 1
      %p131 = scmp.eq.s32.totalorder %s16, 1
      %p132 = scmp.ne.s32.totalorder %s127, %s129
      %p133 = scmp.eq.s32.totalorder %s16, 0
      %p134 = por %p132, %p133
      %p135 = scmp.ne.s32.totalorder %s127, %s129
      %p136 = scmp.eq.s32.totalorder %s21, 1
      %p137 = por %p135, %p136
      %p138 = scmp.ne.s32.totalorder %s129, %s130
      %p139 = scmp.eq.s32.totalorder %s21, 0
      %p140 = por %p138, %p139
      %p141 = scmp.ne.s32.totalorder %s129, %s130
      %p142 = scmp.eq.s32.totalorder %s22, 1
      %p143 = por %p141, %p142
      %p145 = scmp.ne.s32.totalorder %s130, %s144
      %p146 = scmp.eq.s32.totalorder %s22, 0
      %p147 = por %p145, %p146
      %s148 = ssub.s32 %s23, %s35
      %p149 = scmp.eq.s32.totalorder %s148, 0
      %s151 = sadd.s32 %s150, 1
      %s152 = scalar_select %p149, %s150, %s151
      %p155 = pneg %p149
      %p156 = scmp.eq.s32.totalorder %s16, 1
      %p157 = por %p155, %p156
      %p158 = scmp.ne.s32.totalorder %s150, %s153
      %p159 = scmp.eq.s32.totalorder %s16, 0
      %p160 = por %p158, %p159
      %p161 = scmp.ne.s32.totalorder %s150, %s153
      %p162 = scmp.eq.s32.totalorder %s21, 1
      %p163 = por %p161, %p162
      %p164 = scmp.ne.s32.totalorder %s153, %s154
      %p165 = scmp.eq.s32.totalorder %s21, 0
      %p166 = por %p164, %p165
      %p167 = scmp.ne.s32.totalorder %s153, %s154
      %p168 = scmp.eq.s32.totalorder %s22, 1
      %p169 = por %p167, %p168
      %p171 = scmp.ne.s32.totalorder %s154, %s170
      %p172 = scmp.eq.s32.totalorder %s22, 0
      %p173 = por %p171, %p172
      %s174 = ssub.s32 %s23, %s35
      %p175 = scmp.eq.s32.totalorder %s174, 0
      %s177 = sadd.s32 %s176, 1
      %s178 = scalar_select %p175, %s176, %s177
      %p181 = pneg %p175
      %p182 = scmp.eq.s32.totalorder %s16, 1
      %p183 = por %p181, %p182
      %p184 = scmp.ne.s32.totalorder %s176, %s179
      %p185 = scmp.eq.s32.totalorder %s16, 0
      %p186 = por %p184, %p185
      %p187 = scmp.ne.s32.totalorder %s176, %s179
      %p188 = scmp.eq.s32.totalorder %s21, 1
      %p189 = por %p187, %p188
      %p190 = scmp.ne.s32.totalorder %s179, %s180
      %p191 = scmp.eq.s32.totalorder %s21, 0
      %p192 = por %p190, %p191
      %p193 = scmp.ne.s32.totalorder %s179, %s180
      %p194 = scmp.eq.s32.totalorder %s22, 1
      %p195 = por %p193, %p194
      %p197 = scmp.ne.s32.totalorder %s180, %s196
      %p198 = scmp.eq.s32.totalorder %s22, 0
      %p199 = por %p197, %p198
      %p200 = scmp.le.s32.totalorder 1, %s16
      %p201 = scmp.lt.s32.totalorder %s16, 3
      %p202 = pnand %p200, %p201
      %p203 = pneg %p202
      // Predicated region
      $region9: #{tpu_custom_call.1} parent=5 // pred_check
        _
      $region10: #{tpu_custom_call.1} parent=5 // pred_check_branch
        %205 = sbr.rel (%p202) target = $region12
      $region11: #{tpu_custom_call.1} parent=5 // pred_region
        %s206 = ssub.s32 %s16, 1
        // Predicated region
        $region13: #{tpu_custom_call.1} parent=11 // pred_check
          %p207 = pneg %p77
        $region14: #{tpu_custom_call.1} parent=11 // pred_check_branch
          %209 = sbr.rel (%p207) target = $region16
        $region15: #{tpu_custom_call.1} parent=11 // pred_region
          _
        $region16: #{tpu_custom_call.1} parent=11 // pred_fallthru
          _
        // Predicated region
        $region17: #{tpu_custom_call.1} parent=11 // pred_check
          %p210 = pneg %p98
        $region18: #{tpu_custom_call.1} parent=11 // pred_check_branch
          %212 = sbr.rel (%p210) target = $region20
        $region19: #{tpu_custom_call.1} parent=11 // pred_region
          _
        $region20: #{tpu_custom_call.1} parent=11 // pred_fallthru
          _
        // Predicated region
        $region21: #{tpu_custom_call.1} parent=11 // pred_check
          %p213 = pneg %p119
        $region22: #{tpu_custom_call.1} parent=11 // pred_check_branch
          %215 = sbr.rel (%p213) target = $region24
        $region23: #{tpu_custom_call.1} parent=11 // pred_region
          %s217 = ssub.s32 2048, 2048
          %218 = vsyncadd [#allocation4], %s217
          %s219 = sshll.u32 [#allocation3], 4
          %s220 = int_to_ptr.vmem [resolvable:$true] %s219
          %225 = dma.hbm_to_vmem [thread:$0]  %s3, 2048, %s220, [#allocation4], 64, 64, 4
        $region24: #{tpu_custom_call.1} parent=11 // pred_fallthru
          _
        // Predicated region
        $region25: #{tpu_custom_call.1} parent=11 // pred_check
          %p226 = pneg %p140
        $region26: #{tpu_custom_call.1} parent=11 // pred_check_branch
          %228 = sbr.rel (%p226) target = $region28
        $region27: #{tpu_custom_call.1} parent=11 // pred_region
          _
        $region28: #{tpu_custom_call.1} parent=11 // pred_fallthru
          _
      $region12: #{tpu_custom_call.1} parent=5 // pred_fallthru
        _
      %p229 = scmp.lt.s32.totalorder %s16, 2
      // Predicated region
      $region29: #{tpu_custom_call.1} parent=5 // pred_check
        %p230 = pneg %p229
      $region30: #{tpu_custom_call.1} parent=5 // pred_check_branch
        %232 = sbr.rel (%p230) target = $region32
      $region31: #{tpu_custom_call.1} parent=5 // pred_region
        // Predicated region
        $region33: #{tpu_custom_call.1} parent=31 // pred_check
          %p233 = pneg %p50
        $region34: #{tpu_custom_call.1} parent=31 // pred_check_branch
          %235 = sbr.rel (%p233) target = $region36
        $region35: #{tpu_custom_call.1} parent=31 // pred_region
          %s236 = smul.u32 2, %s24
          %p237 = scmp.lt.s32.totalorder %s23, 1
          %s238 = scalar_select %p237, %s23, 1
          %p239 = scmp.lt.s32.totalorder %s236, 1
          %s240 = scalar_select %p239, %s236, 1
          %s241 = smul.addr %s238, 2
          %s242 = sadd.s32 %s240, %s241
          %s243 = smul.addr %s242, 2
          %s244 = scalar_lea.vmem %s0, %s243
          %s245 = smul.u32 2, %s24
        $region36: #{tpu_custom_call.1} parent=31 // pred_fallthru
          _
        // Predicated region
        $region37: #{tpu_custom_call.1} parent=31 // pred_check
          %p246 = pneg %p160
        $region38: #{tpu_custom_call.1} parent=31 // pred_check_branch
          %248 = sbr.rel (%p246) target = $region40
        $region39: #{tpu_custom_call.1} parent=31 // pred_region
          %p249 = scmp.lt.s32.totalorder %s23, 1
          %s250 = scalar_select %p249, %s23, 1
          %s251 = scalar_lea.vmem %s5, %s250
        $region40: #{tpu_custom_call.1} parent=31 // pred_fallthru
          _
      $region32: #{tpu_custom_call.1} parent=5 // pred_fallthru
        _
      %p252 = scmp.le.s32.totalorder 1, %s16
      %p253 = scmp.lt.s32.totalorder %s16, 3
      %p254 = pnand %p252, %p253
      %p255 = pneg %p254
      // Predicated region
      $region41: #{tpu_custom_call.1} parent=5 // pred_check
        _
      $region42: #{tpu_custom_call.1} parent=5 // pred_check_branch
        %257 = sbr.rel (%p254) target = $region44
      $region43: #{tpu_custom_call.1} parent=5 // pred_region
        %s258 = ssub.s32 %s16, 1
        // Predicated region
        $region45: #{tpu_custom_call.1} parent=43 // pred_check
          %p259 = pneg %p119
        $region46: #{tpu_custom_call.1} parent=43 // pred_check_branch
          %261 = sbr.rel (%p259) target = $region48
        $region47: #{tpu_custom_call.1} parent=43 // pred_region
          %262 = dma.done [#allocation4], 2048
        $region48: #{tpu_custom_call.1} parent=43 // pred_fallthru
          _
        %s263 = smul.u32 2, %s26
        %p264 = scmp.lt.s32.totalorder %s25, 1
        %s265 = scalar_select %p264, %s25, 1
        %p266 = scmp.lt.s32.totalorder %s263, 1
        %s267 = scalar_select %p266, %s263, 1
        %s268 = smul.addr %s265, 2
        %s269 = sadd.s32 %s267, %s268
        %s270 = smul.addr %s269, 2
        %s271 = scalar_lea.vmem %s0, %s270
        %p272 = pneg %p56
        %p273 = pneg %p53
        %p274 = pneg %p77
        %p275 = pneg %p74
        %p276 = pneg %p98
        %p277 = pneg %p95
        %p278 = pneg %p119
        %p279 = pneg %p116
        %p280 = pneg %p140
        %p281 = pneg %p137
        %p282 = scmp.lt.s32.totalorder %s25, 1
        %s283 = scalar_select %p282, %s25, 1
        %s284 = scalar_lea.vmem %s5, %s283
        %p285 = pneg %p166
        %p286 = pneg %p163
        %p287 = pneg %p192
        %p288 = pneg %p189
        %s289 = sand.u32 %s179, 1
        %s290 = scalar_lea.sflag [#allocation5], %s289
        %s291 = sand.u32 %s179, 1
        %s292 = scalar_lea.vmem [#allocation6], %s291
        %s293 = smul.u32 2, %s26
        %p294 = scmp.lt.s32.totalorder %s25, 1
        %s295 = scalar_select %p294, %s25, 1
        %p296 = scmp.lt.s32.totalorder %s293, 1
        %s297 = scalar_select %p296, %s293, 1
        %s298 = smul.addr %s295, 2
        %s299 = sadd.s32 %s297, %s298
        %s300 = smul.addr %s299, 2
        %s301 = scalar_lea.vmem %s0, %s300
        %s302 = smul.u32 2, %s26
        %p303 = scmp.lt.s32.totalorder %s25, 1
        %s304 = scalar_select %p303, %s25, 1
        %s305 = scalar_lea.vmem %s5, %s304
        %p307 = scmp.eq.s32.totalorder %s26, 0
        // Predicated region
        $region49: #{tpu_custom_call.1} parent=43 // pred_check
          %p308 = pneg %p307
        $region50: #{tpu_custom_call.1} parent=43 // pred_check_branch
          %310 = sbr.rel (%p308) target = $region52
        $region51: #{tpu_custom_call.1} parent=43 // pred_region
          %v311 = vlaneseq
          %vm312 = vcmp.ge.s32.totalorder %v311, 0
          %vm313 = vcmp.lt.s32.totalorder %v311, 256
          %vm314 = vmand %vm312, %vm313
          %315 = vst.msk [vmem:[#allocation2] sm:$0x3] %vm314, 0.0
        $region52: #{tpu_custom_call.1} parent=43 // pred_fallthru
          _
        %v316 = vld [vmem:[%s301] sm:$0xf]
        %v317 = vld [vmem:[%s1] sm:$0xf]
        %v318 = vld [vmem:[%s2] sm:$0x3]
        %v320 = vlaneseq
        %v321 = vshrl.u32 %v320, 7
        %v322 = vsub.s32 0, %v321
        %v323 = vrot.slane %v318, %v322
        %v324 = vlaneseq
        %v325 = vshrl.u32 %v324, 7
        %v326 = vsub.s32 1, %v325
        %v327 = vrot.slane %v318, %v326
        %v332 = vunpack.c.l.s4 1983009808
        %v333 = vunpack.c.0.s8 %v332
        %v334 = vlaneseq
        %v335 = vshrl.u32 %v334, 7
        %v336 = vsub.s32 %v333, %v335
        %v337 = vrot.slane %v316, %v336
        %v338 = vcombine.high %v337, %v337
        %341 = vxpose.xlu0.c.b16.start [1/8] %v337, 128
        %342 = vxpose.xlu0.c.b16.cont [2/8] 0, 128
        %343 = vxpose.xlu0.c.b16.cont [3/8] 0, 128
        %344 = vxpose.xlu0.c.b16.cont [4/8] 0, 128
        %345 = vxpose.xlu0.c.b16.cont [5/8] 0, 128
        %346 = vxpose.xlu0.c.b16.cont [6/8] 0, 128
        %347 = vxpose.xlu0.c.b16.cont [7/8] 0, 128
        %348 = vxpose.xlu0.c.b16.end [8/8] 0, 128
        %v349 = vpop.trf.xlu0
        %v350 = vpop.trf.xlu0
        %v351 = vpop.trf.xlu0
        %v352 = vpop.trf.xlu0
        %v353 = vpop.trf.xlu0
        %v354 = vpop.trf.xlu0
        %v355 = vpop.trf.xlu0
        %v356 = vpop.trf.xlu0
        %357 = vxpose.xlu0.c.b16.start [1/8] %v338, 128
        %358 = vxpose.xlu0.c.b16.cont [2/8] 0, 128
        %359 = vxpose.xlu0.c.b16.cont [3/8] 0, 128
        %360 = vxpose.xlu0.c.b16.cont [4/8] 0, 128
        %361 = vxpose.xlu0.c.b16.cont [5/8] 0, 128
        %362 = vxpose.xlu0.c.b16.cont [6/8] 0, 128
        %363 = vxpose.xlu0.c.b16.cont [7/8] 0, 128
        %364 = vxpose.xlu0.c.b16.end [8/8] 0, 128
        %v365 = vpop.trf.xlu0
        %v366 = vpop.trf.xlu0
        %v367 = vpop.trf.xlu0
        %v368 = vpop.trf.xlu0
        %v369 = vpop.trf.xlu0
        %v370 = vpop.trf.xlu0
        %v371 = vpop.trf.xlu0
        %v372 = vpop.trf.xlu0
        %v375 = vunpack.c.l.s4 1983009808
        %v376 = vunpack.c.0.s8 %v375
        %v377 = vlaneseq
        %v378 = vshrl.u32 %v377, 7
        %v379 = vsub.s32 %v376, %v378
        %v380 = vrot.slane %v317, %v379
        %v381 = vcombine.high %v380, %v380
        %vm382 = vcmask 23552
        %v384 = vsel %vm382, %v349, 0
        %v387 = vsel %vm382, %v350, 0
        %v390 = vsel %vm382, %v351, 0
        %v393 = vsel %vm382, %v352, 0
        %v396 = vsel %vm382, %v353, 0
        %v399 = vsel %vm382, %v354, 0
        %v402 = vsel %vm382, %v355, 0
        %v405 = vsel %vm382, %v356, 0
        %v408 = vsel %vm382, %v365, 0
        %v411 = vsel %vm382, %v366, 0
        %v414 = vsel %vm382, %v367, 0
        %v417 = vsel %vm382, %v368, 0
        %v420 = vsel %vm382, %v369, 0
        %v423 = vsel %vm382, %v370, 0
        %v426 = vsel %vm382, %v371, 0
        %v429 = vsel %vm382, %v372, 0
        %vm431 = vcmask 1040384
        %vm432 = vcmask 1041408
        %v433 = vsel %vm431, 4294967295, 65535
        %v434 = vsel %vm432, %v433, 0
        %v436 = vand.u32 %v380, %v434
        %v439 = vand.u32 %v381, %v434
        %441 = vmatprep.subr.bf16.mxu0 %v439
        %442 = vmatpush1.bf16.msra.mxu0 %v436
        %443 = vmatprep.subr.bf16.mxu0 0
        %444 = vmatpush1.bf16.msra.mxu0 0
        %445 = vmatprep.subr.bf16.mxu0 0
        %446 = vmatpush1.bf16.msra.mxu0 0
        %447 = vmatprep.subr.bf16.mxu0 0
        %448 = vmatpush1.bf16.msra.mxu0 0
        %449 = vmatprep.subr.bf16.mxu0 0
        %450 = vmatpush1.bf16.msra.mxu0 0
        %451 = vmatprep.subr.bf16.mxu0 0
        %452 = vmatpush1.bf16.msra.mxu0 0
        %453 = vmatprep.subr.bf16.mxu0 0
        %454 = vmatpush1.bf16.msra.mxu0 0
        %455 = vmatprep.subr.bf16.mxu0 0
        %456 = vmatpush1.bf16.msra.mxu0 0
        %457 = vmatprep.subr.bf16.mxu0 0
        %458 = vmatpush1.bf16.msra.mxu0 0
        %459 = vmatprep.subr.bf16.mxu0 0
        %460 = vmatpush1.bf16.msra.mxu0 0
        %461 = vmatprep.subr.bf16.mxu0 0
        %462 = vmatpush1.bf16.msra.mxu0 0
        %463 = vmatprep.subr.bf16.mxu0 0
        %464 = vmatpush1.bf16.msra.mxu0 0
        %465 = vmatprep.subr.bf16.mxu0 0
        %466 = vmatpush1.bf16.msra.mxu0 0
        %467 = vmatprep.subr.bf16.mxu0 0
        %468 = vmatpush1.bf16.msra.mxu0 0
        %469 = vmatprep.subr.bf16.mxu0 0
        %470 = vmatpush1.bf16.msra.mxu0 0
        %471 = vmatprep.subr.bf16.mxu0 0
        %472 = vmatpush1.bf16.msra.mxu0 0
        %473 = vmatprep.mubr.bf16.mxu0 0
        %474 = vmatmul.mubr.bf16.gmra.mrb[0].mxu0 %v384
        %v475 = vpop.f32.mrb[0].mxu0
        %v476 = vadd.f32 %v323, %v475
        %v477 = vpop.f32.mrb[0].mxu0
        %v478 = vadd.f32 %v327, %v477
        %v479 = vpop.f32.mrb[0].mxu0
        %v480 = vadd.f32 %v323, %v479
        %v481 = vpop.f32.mrb[0].mxu0
        %v482 = vadd.f32 %v327, %v481
        %483 = vmatprep.mubr.bf16.mxu0 0
        %484 = vmatmul.mubr.bf16.gmra.mrb[0].mxu0 %v387
        %v485 = vpop.f32.mrb[0].mxu0
        %v486 = vadd.f32 %v323, %v485
        %v487 = vpop.f32.mrb[0].mxu0
        %v488 = vadd.f32 %v327, %v487
        %v489 = vpop.f32.mrb[0].mxu0
        %v490 = vadd.f32 %v323, %v489
        %v491 = vpop.f32.mrb[0].mxu0
        %v492 = vadd.f32 %v327, %v491
        %493 = vmatprep.mubr.bf16.mxu0 0
        %494 = vmatmul.mubr.bf16.gmra.mrb[0].mxu0 %v390
        %v495 = vpop.f32.mrb[0].mxu0
        %v496 = vadd.f32 %v323, %v495
        %v497 = vpop.f32.mrb[0].mxu0
        %v498 = vadd.f32 %v327, %v497
        %v499 = vpop.f32.mrb[0].mxu0
        %v500 = vadd.f32 %v323, %v499
        %v501 = vpop.f32.mrb[0].mxu0
        %v502 = vadd.f32 %v327, %v501
        %503 = vmatprep.mubr.bf16.mxu0 0
        %504 = vmatmul.mubr.bf16.gmra.mrb[0].mxu0 %v393
        %v505 = vpop.f32.mrb[0].mxu0
        %v506 = vadd.f32 %v323, %v505
        %v507 = vpop.f32.mrb[0].mxu0
        %v508 = vadd.f32 %v327, %v507
        %v509 = vpop.f32.mrb[0].mxu0
        %v510 = vadd.f32 %v323, %v509
        %v511 = vpop.f32.mrb[0].mxu0
        %v512 = vadd.f32 %v327, %v511
        %513 = vmatprep.mubr.bf16.mxu0 0
        %514 = vmatmul.mubr.bf16.gmra.mrb[0].mxu0 %v396
        %v515 = vpop.f32.mrb[0].mxu0
        %v516 = vadd.f32 %v323, %v515
        %v517 = vpop.f32.mrb[0].mxu0
        %v518 = vadd.f32 %v327, %v517
        %v519 = vpop.f32.mrb[0].mxu0
        %v520 = vadd.f32 %v323, %v519
        %v521 = vpop.f32.mrb[0].mxu0
        %v522 = vadd.f32 %v327, %v521
        %523 = vmatprep.mubr.bf16.mxu0 0
        %524 = vmatmul.mubr.bf16.gmra.mrb[0].mxu0 %v399
        %v525 = vpop.f32.mrb[0].mxu0
        %v526 = vadd.f32 %v323, %v525
        %v527 = vpop.f32.mrb[0].mxu0
        %v528 = vadd.f32 %v327, %v527
        %v529 = vpop.f32.mrb[0].mxu0
        %v530 = vadd.f32 %v323, %v529
        %v531 = vpop.f32.mrb[0].mxu0
        %v532 = vadd.f32 %v327, %v531
        %533 = vmatprep.mubr.bf16.mxu0 0
        %534 = vmatmul.mubr.bf16.gmra.mrb[0].mxu0 %v402
        %v535 = vpop.f32.mrb[0].mxu0
        %v536 = vadd.f32 %v323, %v535
        %v537 = vpop.f32.mrb[0].mxu0
        %v538 = vadd.f32 %v327, %v537
        %v539 = vpop.f32.mrb[0].mxu0
        %v540 = vadd.f32 %v323, %v539
        %v541 = vpop.f32.mrb[0].mxu0
        %v542 = vadd.f32 %v327, %v541
        %543 = vmatprep.mubr.bf16.mxu0 0
        %544 = vmatmul.mubr.bf16.gmra.mrb[0].mxu0 %v405
        %v545 = vpop.f32.mrb[0].mxu0
        %v546 = vadd.f32 %v323, %v545
        %v547 = vpop.f32.mrb[0].mxu0
        %v548 = vadd.f32 %v327, %v547
        %v549 = vpop.f32.mrb[0].mxu0
        %v550 = vadd.f32 %v323, %v549
        %v551 = vpop.f32.mrb[0].mxu0
        %v552 = vadd.f32 %v327, %v551
        %553 = vmatprep.mubr.bf16.mxu0 0
        %554 = vmatmul.mubr.bf16.gmra.mrb[0].mxu0 %v408
        %v555 = vpop.f32.mrb[0].mxu0
        %v556 = vadd.f32 %v323, %v555
        %v557 = vpop.f32.mrb[0].mxu0
        %v558 = vadd.f32 %v327, %v557
        %v559 = vpop.f32.mrb[0].mxu0
        %v560 = vadd.f32 %v323, %v559
        %v561 = vpop.f32.mrb[0].mxu0
        %v562 = vadd.f32 %v327, %v561
        %563 = vmatprep.mubr.bf16.mxu0 0
        %564 = vmatmul.mubr.bf16.gmra.mrb[0].mxu0 %v411
        %v565 = vpop.f32.mrb[0].mxu0
        %v566 = vadd.f32 %v323, %v565
        %v567 = vpop.f32.mrb[0].mxu0
        %v568 = vadd.f32 %v327, %v567
        %v569 = vpop.f32.mrb[0].mxu0
        %v570 = vadd.f32 %v323, %v569
        %v571 = vpop.f32.mrb[0].mxu0
        %v572 = vadd.f32 %v327, %v571
        %573 = vmatprep.mubr.bf16.mxu0 0
        %574 = vmatmul.mubr.bf16.gmra.mrb[0].mxu0 %v414
        %v575 = vpop.f32.mrb[0].mxu0
        %v576 = vadd.f32 %v323, %v575
        %v577 = vpop.f32.mrb[0].mxu0
        %v578 = vadd.f32 %v327, %v577
        %v579 = vpop.f32.mrb[0].mxu0
        %v580 = vadd.f32 %v323, %v579
        %v581 = vpop.f32.mrb[0].mxu0
        %v582 = vadd.f32 %v327, %v581
        %583 = vmatprep.mubr.bf16.mxu0 0
        %584 = vmatmul.mubr.bf16.gmra.mrb[0].mxu0 %v417
        %v585 = vpop.f32.mrb[0].mxu0
        %v586 = vadd.f32 %v323, %v585
        %v587 = vpop.f32.mrb[0].mxu0
        %v588 = vadd.f32 %v327, %v587
        %v589 = vpop.f32.mrb[0].mxu0
        %v590 = vadd.f32 %v323, %v589
        %v591 = vpop.f32.mrb[0].mxu0
        %v592 = vadd.f32 %v327, %v591
        %593 = vmatprep.mubr.bf16.mxu0 0
        %594 = vmatmul.mubr.bf16.gmra.mrb[0].mxu0 %v420
        %v595 = vpop.f32.mrb[0].mxu0
        %v596 = vadd.f32 %v323, %v595
        %v597 = vpop.f32.mrb[0].mxu0
        %v598 = vadd.f32 %v327, %v597
        %v599 = vpop.f32.mrb[0].mxu0
        %v600 = vadd.f32 %v323, %v599
        %v601 = vpop.f32.mrb[0].mxu0
        %v602 = vadd.f32 %v327, %v601
        %603 = vmatprep.mubr.bf16.mxu0 0
        %604 = vmatmul.mubr.bf16.gmra.mrb[0].mxu0 %v423
        %v605 = vpop.f32.mrb[0].mxu0
        %v606 = vadd.f32 %v323, %v605
        %v607 = vpop.f32.mrb[0].mxu0
        %v608 = vadd.f32 %v327, %v607
        %v609 = vpop.f32.mrb[0].mxu0
        %v610 = vadd.f32 %v323, %v609
        %v611 = vpop.f32.mrb[0].mxu0
        %v612 = vadd.f32 %v327, %v611
        %613 = vmatprep.mubr.bf16.mxu0 0
        %614 = vmatmul.mubr.bf16.gmra.mrb[0].mxu0 %v426
        %v615 = vpop.f32.mrb[0].mxu0
        %v616 = vadd.f32 %v323, %v615
        %v617 = vpop.f32.mrb[0].mxu0
        %v618 = vadd.f32 %v327, %v617
        %v619 = vpop.f32.mrb[0].mxu0
        %v620 = vadd.f32 %v323, %v619
        %v621 = vpop.f32.mrb[0].mxu0
        %v622 = vadd.f32 %v327, %v621
        %623 = vmatprep.mubr.bf16.mxu0 0
        %624 = vmatmul.mubr.bf16.gmra.mrb[0].mxu0 %v429
        %v625 = vpop.f32.mrb[0].mxu0
        %v626 = vadd.f32 %v323, %v625
        %v627 = vpop.f32.mrb[0].mxu0
        %v628 = vadd.f32 %v327, %v627
        %v629 = vpop.f32.mrb[0].mxu0
        %v630 = vadd.f32 %v323, %v629
        %v631 = vpop.f32.mrb[0].mxu0
        %v632 = vadd.f32 %v327, %v631
        %633 = vdwg.mxu0
        %v634 = vmax.f32 %v476, 0.0
        %v635 = vmax.f32 %v478, 0.0
        %v636 = vmax.f32 %v480, 0.0
        %v637 = vmax.f32 %v482, 0.0
        %v638 = vmax.f32 %v486, 0.0
        %v639 = vmax.f32 %v488, 0.0
        %v640 = vmax.f32 %v490, 0.0
        %v641 = vmax.f32 %v492, 0.0
        %v642 = vmax.f32 %v496, 0.0
        %v643 = vmax.f32 %v498, 0.0
        %v644 = vmax.f32 %v500, 0.0
        %v645 = vmax.f32 %v502, 0.0
        %v646 = vmax.f32 %v506, 0.0
        %v647 = vmax.f32 %v508, 0.0
        %v648 = vmax.f32 %v510, 0.0
        %v649 = vmax.f32 %v512, 0.0
        %v650 = vmax.f32 %v516, 0.0
        %v651 = vmax.f32 %v518, 0.0
        %v652 = vmax.f32 %v520, 0.0
        %v653 = vmax.f32 %v522, 0.0
        %v654 = vmax.f32 %v526, 0.0
        %v655 = vmax.f32 %v528, 0.0
        %v656 = vmax.f32 %v530, 0.0
        %v657 = vmax.f32 %v532, 0.0
        %v658 = vmax.f32 %v536, 0.0
        %v659 = vmax.f32 %v538, 0.0
        %v660 = vmax.f32 %v540, 0.0
        %v661 = vmax.f32 %v542, 0.0
        %v662 = vmax.f32 %v546, 0.0
        %v663 = vmax.f32 %v548, 0.0
        %v664 = vmax.f32 %v550, 0.0
        %v665 = vmax.f32 %v552, 0.0
        %v666 = vmax.f32 %v556, 0.0
        %v667 = vmax.f32 %v558, 0.0
        %v668 = vmax.f32 %v560, 0.0
        %v669 = vmax.f32 %v562, 0.0
        %v670 = vmax.f32 %v566, 0.0
        %v671 = vmax.f32 %v568, 0.0
        %v672 = vmax.f32 %v570, 0.0
        %v673 = vmax.f32 %v572, 0.0
        %v674 = vmax.f32 %v576, 0.0
        %v675 = vmax.f32 %v578, 0.0
        %v676 = vmax.f32 %v580, 0.0
        %v677 = vmax.f32 %v582, 0.0
        %v678 = vmax.f32 %v586, 0.0
        %v679 = vmax.f32 %v588, 0.0
        %v680 = vmax.f32 %v590, 0.0
        %v681 = vmax.f32 %v592, 0.0
        %v682 = vmax.f32 %v596, 0.0
        %v683 = vmax.f32 %v598, 0.0
        %v684 = vmax.f32 %v600, 0.0
        %v685 = vmax.f32 %v602, 0.0
        %v686 = vmax.f32 %v606, 0.0
        %v687 = vmax.f32 %v608, 0.0
        %v688 = vmax.f32 %v610, 0.0
        %v689 = vmax.f32 %v612, 0.0
        %v690 = vmax.f32 %v616, 0.0
        %v691 = vmax.f32 %v618, 0.0
        %v692 = vmax.f32 %v620, 0.0
        %v693 = vmax.f32 %v622, 0.0
        %v694 = vmax.f32 %v626, 0.0
        %v695 = vmax.f32 %v628, 0.0
        %v696 = vmax.f32 %v630, 0.0
        %v697 = vmax.f32 %v632, 0.0
        %v698 = vld [vmem:[#allocation2] sm:$0x3]
        %v699 = vadd.f32 %v634, %v636
        %v700 = vadd.f32 %v699, %v638
        %v701 = vadd.f32 %v700, %v640
        %v702 = vadd.f32 %v701, %v642
        %v703 = vadd.f32 %v702, %v644
        %v704 = vadd.f32 %v703, %v646
        %v705 = vadd.f32 %v704, %v648
        %v706 = vadd.f32 %v705, %v650
        %v707 = vadd.f32 %v706, %v652
        %v708 = vadd.f32 %v707, %v654
        %v709 = vadd.f32 %v708, %v656
        %v710 = vadd.f32 %v709, %v658
        %v711 = vadd.f32 %v710, %v660
        %v712 = vadd.f32 %v711, %v662
        %v713 = vadd.f32 %v712, %v664
        %v714 = vadd.f32 %v713, %v666
        %v715 = vadd.f32 %v714, %v668
        %v716 = vadd.f32 %v715, %v670
        %v717 = vadd.f32 %v716, %v672
        %v718 = vadd.f32 %v717, %v674
        %v719 = vadd.f32 %v718, %v676
        %v720 = vadd.f32 %v719, %v678
        %v721 = vadd.f32 %v720, %v680
        %v722 = vadd.f32 %v721, %v682
        %v723 = vadd.f32 %v722, %v684
        %v724 = vadd.f32 %v723, %v686
        %v725 = vadd.f32 %v724, %v688
        %v726 = vadd.f32 %v725, %v690
        %v727 = vadd.f32 %v726, %v692
        %v728 = vadd.f32 %v727, %v694
        %v729 = vadd.f32 %v728, %v696
        %v730 = vrot.slane %v729, 4
        %v731 = vadd.f32 %v729, %v730
        %v732 = vrot.slane %v731, 2
        %v733 = vadd.f32 %v731, %v732
        %v734 = vrot.slane %v733, 1
        %v735 = vadd.f32 %v733, %v734
        %v736 = vadd.f32 %v635, %v637
        %v737 = vadd.f32 %v736, %v639
        %v738 = vadd.f32 %v737, %v641
        %v739 = vadd.f32 %v738, %v643
        %v740 = vadd.f32 %v739, %v645
        %v741 = vadd.f32 %v740, %v647
        %v742 = vadd.f32 %v741, %v649
        %v743 = vadd.f32 %v742, %v651
        %v744 = vadd.f32 %v743, %v653
        %v745 = vadd.f32 %v744, %v655
        %v746 = vadd.f32 %v745, %v657
        %v747 = vadd.f32 %v746, %v659
        %v748 = vadd.f32 %v747, %v661
        %v749 = vadd.f32 %v748, %v663
        %v750 = vadd.f32 %v749, %v665
        %v751 = vadd.f32 %v750, %v667
        %v752 = vadd.f32 %v751, %v669
        %v753 = vadd.f32 %v752, %v671
        %v754 = vadd.f32 %v753, %v673
        %v755 = vadd.f32 %v754, %v675
        %v756 = vadd.f32 %v755, %v677
        %v757 = vadd.f32 %v756, %v679
        %v758 = vadd.f32 %v757, %v681
        %v759 = vadd.f32 %v758, %v683
        %v760 = vadd.f32 %v759, %v685
        %v761 = vadd.f32 %v760, %v687
        %v762 = vadd.f32 %v761, %v689
        %v763 = vadd.f32 %v762, %v691
        %v764 = vadd.f32 %v763, %v693
        %v765 = vadd.f32 %v764, %v695
        %v766 = vadd.f32 %v765, %v697
        %v767 = vrot.slane %v766, 4
        %v768 = vadd.f32 %v766, %v767
        %v769 = vrot.slane %v768, 2
        %v770 = vadd.f32 %v768, %v769
        %v771 = vrot.slane %v770, 1
        %v772 = vadd.f32 %v770, %v771
        %v775 = vcombine.low %v735, %v772
        %v777 = vunpack.c.l.s4 1966171168
        %v778 = vunpack.c.0.s8 %v777
        %v779 = vlaneseq
        %v780 = vshrl.u32 %v779, 7
        %v781 = vsub.s32 %v778, %v780
        %v782 = vrot.slane %v775, %v781
        %v784 = vunpack.c.l.s4 1966171168
        %v785 = vunpack.c.0.s8 %v784
        %v786 = vlaneseq
        %v787 = vshrl.u32 %v786, 7
        %v788 = vsub.s32 %v785, %v787
        %v789 = vrot.slane %v782, %v788
        %v791 = vadd.f32 %v698, %v789
        %v792 = vlaneseq
        %vm793 = vcmp.ge.s32.totalorder %v792, 0
        %vm794 = vcmp.lt.s32.totalorder %v792, 256
        %vm795 = vmand %vm793, %vm794
        %796 = vst.msk [vmem:[#allocation2] sm:$0x3] %vm795, %v791
        // Predicated region
        $region53: #{tpu_custom_call.1} parent=43 // pred_check
          %p797 = pneg %p307
        $region54: #{tpu_custom_call.1} parent=43 // pred_check_branch
          %799 = sbr.rel (%p797) target = $region56
        $region55: #{tpu_custom_call.1} parent=43 // pred_region
          %v800 = vld [vmem:[#allocation2] sm:$0x3]
          %v802 = vlaneseq
          %v803 = vshrl.u32 %v802, 7
          %v804 = vsub.s32 0, %v803
          %v805 = vrot.slane %v800, %v804
          %v806 = vlaneseq
          %v807 = vshrl.u32 %v806, 7
          %v808 = vsub.s32 1, %v807
          %v809 = vrot.slane %v800, %v808
          %v812 = vpack.c.bf16 %v805, %v805
          %v813 = vpack.c.bf16 %v809, %v809
          %v814 = vld [vmem:[#allocation3] sm:$0xf]
          %v815 = vld [vmem:[#allocation3 + $0x4] sm:$0xf]
          %v816 = vld [vmem:[#allocation3 + $0x8] sm:$0xf]
          %v817 = vld [vmem:[#allocation3 + $0xc] sm:$0xf]
          %v818 = vld [vmem:[#allocation3 + $0x10] sm:$0xf]
          %v819 = vld [vmem:[#allocation3 + $0x14] sm:$0xf]
          %v820 = vld [vmem:[#allocation3 + $0x18] sm:$0xf]
          %v821 = vld [vmem:[#allocation3 + $0x1c] sm:$0xf]
          %v822 = vld [vmem:[#allocation3 + $0x20] sm:$0xf]
          %v823 = vld [vmem:[#allocation3 + $0x24] sm:$0xf]
          %v824 = vld [vmem:[#allocation3 + $0x28] sm:$0xf]
          %v825 = vld [vmem:[#allocation3 + $0x2c] sm:$0xf]
          %v826 = vld [vmem:[#allocation3 + $0x30] sm:$0xf]
          %v827 = vld [vmem:[#allocation3 + $0x34] sm:$0xf]
          %v828 = vld [vmem:[#allocation3 + $0x38] sm:$0xf]
          %v829 = vld [vmem:[#allocation3 + $0x3c] sm:$0xf]
          %v830 = vld [vmem:[#allocation3 + $0x40] sm:$0xf]
          %v831 = vld [vmem:[#allocation3 + $0x44] sm:$0xf]
          %v832 = vld [vmem:[#allocation3 + $0x48] sm:$0xf]
          %v833 = vld [vmem:[#allocation3 + $0x4c] sm:$0xf]
          %v834 = vld [vmem:[#allocation3 + $0x50] sm:$0xf]
          %v835 = vld [vmem:[#allocation3 + $0x54] sm:$0xf]
          %v836 = vld [vmem:[#allocation3 + $0x58] sm:$0xf]
          %v837 = vld [vmem:[#allocation3 + $0x5c] sm:$0xf]
          %v838 = vld [vmem:[#allocation3 + $0x60] sm:$0xf]
          %v839 = vld [vmem:[#allocation3 + $0x64] sm:$0xf]
          %v840 = vld [vmem:[#allocation3 + $0x68] sm:$0xf]
          %v841 = vld [vmem:[#allocation3 + $0x6c] sm:$0xf]
          %v842 = vld [vmem:[#allocation3 + $0x70] sm:$0xf]
          %v843 = vld [vmem:[#allocation3 + $0x74] sm:$0xf]
          %v844 = vld [vmem:[#allocation3 + $0x78] sm:$0xf]
          %v845 = vld [vmem:[#allocation3 + $0x7c] sm:$0xf]
          %v846 = vld [vmem:[%s4] sm:$0x1]
          %v879 = vunpack.c.l.b16 %v814
          %v880 = vunpack.c.l.b16 %v815
          %v881 = vunpack.c.l.b16 %v816
          %v882 = vunpack.c.l.b16 %v817
          %v883 = vunpack.c.l.b16 %v818
          %v884 = vunpack.c.l.b16 %v819
          %v885 = vunpack.c.l.b16 %v820
          %v886 = vunpack.c.l.b16 %v821
          %v887 = vunpack.c.l.b16 %v822
          %v888 = vunpack.c.l.b16 %v823
          %v889 = vunpack.c.l.b16 %v824
          %v890 = vunpack.c.l.b16 %v825
          %v891 = vunpack.c.l.b16 %v826
          %v892 = vunpack.c.l.b16 %v827
          %v893 = vunpack.c.l.b16 %v828
          %v894 = vunpack.c.l.b16 %v829
          %v895 = vunpack.c.l.b16 %v830
          %v896 = vunpack.c.l.b16 %v831
          %v897 = vunpack.c.l.b16 %v832
          %v898 = vunpack.c.l.b16 %v833
          %v899 = vunpack.c.l.b16 %v834
          %v900 = vunpack.c.l.b16 %v835
          %v901 = vunpack.c.l.b16 %v836
          %v902 = vunpack.c.l.b16 %v837
          %v903 = vunpack.c.l.b16 %v838
          %v904 = vunpack.c.l.b16 %v839
          %v905 = vunpack.c.l.b16 %v840
          %v906 = vunpack.c.l.b16 %v841
          %v907 = vunpack.c.l.b16 %v842
          %v908 = vunpack.c.l.b16 %v843
          %v909 = vunpack.c.l.b16 %v844
          %v910 = vunpack.c.l.b16 %v845
          %v911 = vpack.c.b16 %v880, %v879
          %v912 = vpack.c.b16 %v882, %v881
          %v913 = vpack.c.b16 %v884, %v883
          %v914 = vpack.c.b16 %v886, %v885
          %v915 = vpack.c.b16 %v888, %v887
          %v916 = vpack.c.b16 %v890, %v889
          %v917 = vpack.c.b16 %v892, %v891
          %v918 = vpack.c.b16 %v894, %v893
          %v919 = vpack.c.b16 %v896, %v895
          %v920 = vpack.c.b16 %v898, %v897
          %v921 = vpack.c.b16 %v900, %v899
          %v922 = vpack.c.b16 %v902, %v901
          %v923 = vpack.c.b16 %v904, %v903
          %v924 = vpack.c.b16 %v906, %v905
          %v925 = vpack.c.b16 %v908, %v907
          %v926 = vpack.c.b16 %v910, %v909
          %943 = vmatprep.subr.bf16.mxu0 0
          %944 = vmatpush1.bf16.msra.mxu0 %v911
          %945 = vmatprep.subr.bf16.mxu0 0
          %946 = vmatpush1.bf16.msra.mxu0 %v912
          %947 = vmatprep.subr.bf16.mxu0 0
          %948 = vmatpush1.bf16.msra.mxu0 %v913
          %949 = vmatprep.subr.bf16.mxu0 0
          %950 = vmatpush1.bf16.msra.mxu0 %v914
          %951 = vmatprep.subr.bf16.mxu0 0
          %952 = vmatpush1.bf16.msra.mxu0 %v915
          %953 = vmatprep.subr.bf16.mxu0 0
          %954 = vmatpush1.bf16.msra.mxu0 %v916
          %955 = vmatprep.subr.bf16.mxu0 0
          %956 = vmatpush1.bf16.msra.mxu0 %v917
          %957 = vmatprep.subr.bf16.mxu0 0
          %958 = vmatpush1.bf16.msra.mxu0 %v918
          %959 = vmatprep.subr.bf16.mxu0 0
          %960 = vmatpush1.bf16.msra.mxu0 %v919
          %961 = vmatprep.subr.bf16.mxu0 0
          %962 = vmatpush1.bf16.msra.mxu0 %v920
          %963 = vmatprep.subr.bf16.mxu0 0
          %964 = vmatpush1.bf16.msra.mxu0 %v921
          %965 = vmatprep.subr.bf16.mxu0 0
          %966 = vmatpush1.bf16.msra.mxu0 %v922
          %967 = vmatprep.subr.bf16.mxu0 0
          %968 = vmatpush1.bf16.msra.mxu0 %v923
          %969 = vmatprep.subr.bf16.mxu0 0
          %970 = vmatpush1.bf16.msra.mxu0 %v924
          %971 = vmatprep.subr.bf16.mxu0 0
          %972 = vmatpush1.bf16.msra.mxu0 %v925
          %973 = vmatprep.subr.bf16.mxu0 0
          %974 = vmatpush1.bf16.msra.mxu0 %v926
          %975 = vmatprep.mubr.bf16.mxu0 %v813
          %976 = vmatmul.mubr.bf16.gmra.mrb[0].mxu0 %v812
          %v977 = vpop.f32.mrb[0].mxu0
          %v978 = vadd.f32 %v846, %v977
          %v979 = vpop.f32.mrb[0].mxu0
          %v980 = vpop.f32.mrb[0].mxu0
          %v981 = vpop.f32.mrb[0].mxu0
          %982 = vdwg.mxu0
          %v983 = vmax.f32 %v978, 0.0
          %v984 = vld [vmem:[%s305] sm:$0x1]
          %v985 = vmul.f32 %v983, %v984
          %986 = vst [vmem:[%s292] sm:$0x1] %v985
        $region56: #{tpu_custom_call.1} parent=43 // pred_fallthru
          _
        %s987 = sand.u32 %s179, 1
        %s988 = scalar_lea.sflag [#allocation5], %s987
        %s989 = sand.u32 %s179, 1
        %s990 = scalar_lea.vmem [#allocation6], %s989
        // Predicated region
        $region57: #{tpu_custom_call.1} parent=43 // pred_check
          %p991 = pneg %p189
        $region58: #{tpu_custom_call.1} parent=43 // pred_check_branch
          %993 = sbr.rel (%p991) target = $region60
        $region59: #{tpu_custom_call.1} parent=43 // pred_region
          %s995 = ssub.s32 16, 16
          %996 = vsyncadd %s988, %s995
          %s997 = smul.addr %s25, 16
          %s998 = scalar_lea.hbm %s6, %s997
          %s1000 = sshll.u32 %s990, 4
          %s1001 = int_to_ptr.vmem [resolvable:$true] %s1000
          %1003 = dma.vmem_to_hbm [thread:$0]  %s1001, 16, %s998, %s988
        $region60: #{tpu_custom_call.1} parent=43 // pred_fallthru
          _
      $region44: #{tpu_custom_call.1} parent=5 // pred_fallthru
        _
      %p1004 = scmp.le.s32.totalorder 2, %s16
      // Predicated region
      $region61: #{tpu_custom_call.1} parent=5 // pred_check
        %p1005 = pneg %p1004
      $region62: #{tpu_custom_call.1} parent=5 // pred_check_branch
        %1007 = sbr.rel (%p1005) target = $region64
      $region63: #{tpu_custom_call.1} parent=5 // pred_region
        %s1008 = ssub.s32 %s16, 2
        // Predicated region
        $region65: #{tpu_custom_call.1} parent=63 // pred_check
          %p1009 = pneg %p195
        $region66: #{tpu_custom_call.1} parent=63 // pred_check_branch
          %1011 = sbr.rel (%p1009) target = $region68
        $region67: #{tpu_custom_call.1} parent=63 // pred_region
          %s1012 = sand.u32 %s180, 1
          %s1013 = scalar_lea.sflag [#allocation5], %s1012
          %s1014 = sand.u32 %s180, 1
          %s1015 = scalar_lea.vmem [#allocation6], %s1014
          %1016 = dma.done %s1013, 16
        $region68: #{tpu_custom_call.1} parent=63 // pred_fallthru
          _
      $region64: #{tpu_custom_call.1} parent=5 // pred_fallthru
        _
    $region6: #{tpu_custom_call.1} parent=1 // loop_footer
      %s20 = sadd.s32 1, %s16
    $region7: #{tpu_custom_call.1} parent=1 // loop_footer_branch
      %15 = sbr.rel target = $region3
    $region8: #{tpu_custom_call.1} parent=1 // loop_exit
      _
    %1017 = vsyncpa [#allocation4], 1
    %s1018 = scalar_lea.sflag [#allocation4], 1
    %1019 = vsyncpa %s1018, 1
    %1020 = vsyncpa [#allocation5], 1
    %s1021 = scalar_lea.sflag [#allocation5], 1
    %1022 = vsyncpa %s1021, 1

</llo_original>
